<compile_context>
chip_gen: v7x
topology: tpu7x:2x2x1
jax: 0.10.0
libtpu: 0.0.40
codegen_flags: <defaults>
</compile_context>

<pallas_src>
import functools

import jax
import jax.numpy as jnp
from jax import lax
from jax.experimental import pallas as pl
from jax.experimental.pallas import tpu as pltpu

EPS = 1e-5
_MXU_DTYPE = jnp.float32      # flip to jnp.bfloat16 on v6e/v7x once the tolerance allows
_MXU_K_TARGET = 256           # per-dot contraction target (fills v6e/v7x 256-deep, v5e 128-deep)


def _tap_group(c):
    """Taps per accumulated dot so the contraction (group * c) reaches the MXU depth target."""
    return max(1, min(9, -(-_MXU_K_TARGET // c)))


# ---------------------------------------------------------------------------
# Fused Pallas kernel
# ---------------------------------------------------------------------------
def _residual_block_kernel(x_ref, w1_ref, w2_ref, bn_ref, o_ref, *,
                           cin, cout, ho, wo, has_projection, conv1_in_kernel):
    """Fully fused residual block on (channels, M)-transposed, lane-dense slabs.

    x_ref:  (Cin, M) x slab when conv1_in_kernel (stride==1), else (9*Cin, M) host im2col slab.
    w1_ref: (Cout, 9*Cin), or (2*Cout, 9*Cin) with the 1x1 projection weights embedded in the
            center-tap columns of the bottom Cout rows (shortcut folded into conv1's matmul).
    w2_ref: (Cout, 9*Cout)
    bn_ref: (Cout, 6)   columns: g1, b1, g2, b2, gs, bs
    o_ref:  (Cout, M)   M = N*Ho*Wo flattened as (n, ho, wo)
    """
    m = o_ref.shape[1]
    hw = ho * wo
    inv_m = 1.0 / m
    bn_p = bn_ref[...]

    def mm(a, b):  # MXU matmul, f32 accumulate
        return jnp.dot(a.astype(_MXU_DTYPE), b.astype(_MXU_DTYPE),
                       preferred_element_type=jnp.float32)

    # ---- 3x3 tap machinery: static lane roll + in-kernel validity masks ----------------------
    lane = lax.broadcasted_iota(jnp.int32, (1, m), 1)
    if (ho & (ho - 1)) == 0 and (wo & (wo - 1)) == 0:   # pow2 spatial dims: bit ops only
        pos = lane & (hw - 1)
        hpos = pos >> (wo.bit_length() - 1)
        wpos = pos & (wo - 1)
    else:
        pos = lane % hw
        hpos = pos // wo
        wpos = pos - hpos * wo

    offs, masks = [], []
    for kh in range(3):
        for kw in range(3):
            dh, dw = kh - 1, kw - 1
            ok = ((hpos + dh >= 0) & (hpos + dh < ho) &
                  (wpos + dw >= 0) & (wpos + dw < wo))
            offs.append(dh * wo + dw)
            masks.append(ok.astype(jnp.float32))

    def tap(src, k):
        # src[:, j] -> src[:, j + offs[k]]; wrap-around across image/batch edges is zero-masked.
        off = offs[k]
        t = src if off == 0 else pltpu.roll(src, (-off) % m, axis=1)
        return t * masks[k]

    def conv3x3(w_ref, src, c):
        # Accumulate over tap groups: no (9*C, M) slab, contraction >= _MXU_K_TARGET per dot.
        group = _tap_group(c)
        acc = None
        for g0 in range(0, 9, group):
            g1 = min(g0 + group, 9)
            ts = [tap(src, k) for k in range(g0, g1)]
            slab = ts[0] if len(ts) == 1 else jnp.concatenate(ts, axis=0)
            part = mm(w_ref[:, g0 * c:g1 * c], slab)
            acc = part if acc is None else acc + part
        return acc

    def bn(acc, col):
        # Training-mode BatchNorm over the full (N, Ho, Wo) extent; two-pass (centered) variance.
        g = bn_p[:, 2 * col:2 * col + 1]
        b = bn_p[:, 2 * col + 1:2 * col + 2]
        mean = jnp.sum(acc, axis=1, keepdims=True) * inv_m
        cent = acc - mean
        var = jnp.sum(cent * cent, axis=1, keepdims=True) * inv_m
        return cent * (g * lax.rsqrt(var + EPS)) + b

    # ---- conv1 (+ folded 1x1 projection shortcut rows) ---------------------------------------
    if conv1_in_kernel:
        x = x_ref[...]                                    # (Cin, M), stride == 1
        acc_all = conv3x3(w1_ref, x, cin)
        identity = x
    else:
        acc_all = mm(w1_ref[...], x_ref[...])             # single dot, contraction 9*Cin
        identity = None                                   # stride != 1 always has a projection

    out1 = jnp.maximum(bn(acc_all[:cout, :], 0), 0.0)     # conv1 -> BN1 -> ReLU
    sc = bn(acc_all[cout:, :], 2) if has_projection else identity

    # ---- conv2 -> BN2, add shortcut, final ReLU -----------------------------------------------
    acc2 = conv3x3(w2_ref, out1, cout)
    o_ref[...] = jnp.maximum(bn(acc2, 1) + sc, 0.0).astype(o_ref.dtype)


# ---------------------------------------------------------------------------
# Host-side layout plumbing (plain JAX)
# ---------------------------------------------------------------------------
def _im2col_T(x_nhwc, stride):
    """(9*C, N*Ho*Wo) transposed im2col slab for a 3x3/pad=1 conv, contraction order (kh,kw,c)."""
    N, H, W, C = x_nhwc.shape
    Ho = (H + 2 - 3) // stride + 1
    Wo = (W + 2 - 3) // stride + 1
    xp = jnp.pad(x_nhwc, ((0, 0), (1, 1), (1, 1), (0, 0)))
    cols = []
    for kh in range(3):
        for kw in range(3):
            v = lax.slice(
                xp, (0, kh, kw, 0),
                (N, kh + (Ho - 1) * stride + 1, kw + (Wo - 1) * stride + 1, C),
                (1, stride, stride, 1))                   # (N, Ho, Wo, C)
            cols.append(v.reshape(N * Ho * Wo, C).T)      # (C, M)
    return jnp.concatenate(cols, axis=0), Ho, Wo          # (9*C, M)


def _w3x3_T(w_oihw):
    """(Cout, Cin, 3, 3) -> (Cout, 9*Cin), contraction order (kh, kw, cin)."""
    Cout, Cin, KH, KW = w_oihw.shape
    return jnp.transpose(w_oihw, (0, 2, 3, 1)).reshape(Cout, KH * KW * Cin).astype(jnp.float32)


def residual_block_forward(x_nchw, params, *, stride):
    """ResidualBlock.forward. x: (N, Cin, H, W) f32 -> (N, Cout, Ho, Wo) f32."""
    N, Cin, H, W = x_nchw.shape
    Cout = params["w1"].shape[0]
    has_projection = (stride != 1) or (Cin != Cout)
    conv1_in_kernel = (stride == 1)                       # stride > 1 keeps host im2col
    Ho = (H + 2 - 3) // stride + 1
    Wo = (W + 2 - 3) // stride + 1
    M = N * Ho * Wo

    if conv1_in_kernel:
        xin = jnp.transpose(x_nchw, (1, 0, 2, 3)).reshape(Cin, M).astype(jnp.float32)
    else:
        x_nhwc = jnp.transpose(x_nchw, (0, 2, 3, 1)).astype(jnp.float32)
        xin, ho2, wo2 = _im2col_T(x_nhwc, stride)
        assert (ho2, wo2) == (Ho, Wo)

    # conv1 lhs; 1x1 projection weights folded into the center-tap columns as extra output rows.
    w1 = _w3x3_T(params["w1"])                                         # (Cout, 9*Cin)
    if has_projection:
        ws_emb = jnp.zeros((Cout, 9 * Cin), jnp.float32)
        ws_emb = ws_emb.at[:, 4 * Cin:5 * Cin].set(
            params["ws"].reshape(Cout, Cin).astype(jnp.float32))
        w1 = jnp.concatenate([w1, ws_emb], axis=0)                     # (2*Cout, 9*Cin)
    w2 = _w3x3_T(params["w2"])                                         # (Cout, 9*Cout)

    def _col(name):
        p = params.get(name)
        if p is None:                                                  # identity shortcut
            return jnp.full((Cout, 1), 1.0 if name[0] == "g" else 0.0, jnp.float32)
        return p.reshape(Cout, 1).astype(jnp.float32)

    bn = jnp.concatenate([_col("g1"), _col("b1"), _col("g2"), _col("b2"),
                          _col("gs"), _col("bs")], axis=1)             # (Cout, 6)

    # Fused single-program working-set guard (see header TODO for the tiled 3-pass pipeline).
    est = 4 * M * (xin.shape[0] + w1.shape[0] + 4 * Cout
                   + _tap_group(Cout) * Cout
                   + (_tap_group(Cin) * Cin if conv1_in_kernel else 0))
    if est > 48 * 1024 * 1024:
        raise NotImplementedError(
            "working set exceeds the fused-kernel VMEM budget; needs the tiled 3-pass pipeline")

    kern = functools.partial(
        _residual_block_kernel, cin=Cin, cout=Cout, ho=Ho, wo=Wo,
        has_projection=has_projection, conv1_in_kernel=conv1_in_kernel)

    inputs = (xin, w1, w2, bn)
    out = pl.pallas_call(
        kern,
        out_shape=jax.ShapeDtypeStruct((Cout, M), jnp.float32),
        grid=(1,),
        in_specs=[pl.BlockSpec(a.shape, lambda i: (0, 0)) for a in inputs],
        out_specs=pl.BlockSpec((Cout, M), lambda i: (0, 0)),
        compiler_params=pltpu.CompilerParams(
            dimension_semantics=("arbitrary",),
            vmem_limit_bytes=64 * 1024 * 1024),
    )(*inputs)

    # (Cout, N*Ho*Wo) -> NCHW
    return jnp.transpose(out.reshape(Cout, N, Ho, Wo), (1, 0, 2, 3))


# ---------------------------------------------------------------------------
# Pure-JAX reference (mirrors the PyTorch module in training mode)
# ---------------------------------------------------------------------------
def residual_block_reference(x, params, *, stride):
    Cin = x.shape[1]
    Cout = params["w1"].shape[0]

    def conv(x, w, s, pad):
        return lax.conv_general_dilated(
            x, w, (s, s), [(pad, pad), (pad, pad)],
            dimension_numbers=("NCHW", "OIHW", "NCHW"))

    def bn(x, g, b):
        mean = x.mean(axis=(0, 2, 3), keepdims=True)
        var = ((x - mean) ** 2).mean(axis=(0, 2, 3), keepdims=True)
        return (x - mean) * lax.rsqrt(var + EPS) * g.reshape(1, -1, 1, 1) + b.reshape(1, -1, 1, 1)

    out = jnp.maximum(bn(conv(x, params["w1"], stride, 1), params["g1"], params["b1"]), 0.0)
    out = bn(conv(out, params["w2"], 1, 1), params["g2"], params["b2"])
    if stride != 1 or Cin != Cout:
        sc = bn(conv(x, params["ws"], stride, 0), params["gs"], params["bs"])
    else:
        sc = x
    return jnp.maximum(out + sc, 0.0)


# ---------------------------------------------------------------------------
def _make_params(key, cin, cout, projection):
    ks = jax.random.split(key, 9)
    p = {
        "w1": jax.random.normal(ks[0], (cout, cin, 3, 3), jnp.float32) * 0.2,
        "g1": jax.random.uniform(ks[1], (cout,), jnp.float32, 0.5, 1.5),
        "b1": jax.random.normal(ks[2], (cout,), jnp.float32) * 0.1,
        "w2": jax.random.normal(ks[3], (cout, cout, 3, 3), jnp.float32) * 0.2,
        "g2": jax.random.uniform(ks[4], (cout,), jnp.float32, 0.5, 1.5),
        "b2": jax.random.normal(ks[5], (cout,), jnp.float32) * 0.1,
    }
    if projection:
        p["ws"] = jax.random.normal(ks[6], (cout, cin, 1, 1), jnp.float32) * 0.2
        p["gs"] = jax.random.uniform(ks[7], (cout,), jnp.float32, 0.5, 1.5)
        p["bs"] = jax.random.normal(ks[8], (cout,), jnp.float32) * 0.1
    return p


if __name__ == "__main__":
    key = jax.random.PRNGKey(0)
    # (N, Cin, H, W, Cout, stride): projection/stride-2 (host im2col path), projection/stride-1
    # and identity/stride-1 (in-kernel conv1-tap path) configurations of the module.
    configs = [(2, 4, 16, 16, 8, 2), (2, 4, 16, 16, 8, 1), (2, 8, 16, 16, 8, 1)]
    for N, Cin, H, W, Cout, stride in configs:
        key, kp, kx = jax.random.split(key, 3)
        projection = (stride != 1) or (Cin != Cout)
        params = _make_params(kp, Cin, Cout, projection)
        x = jax.random.normal(kx, (N, Cin, H, W), jnp.float32)

        out = jax.block_until_ready(residual_block_forward(x, params, stride=stride))
        ref = jax.block_until_ready(residual_block_reference(x, params, stride=stride))

        Ho = (H + 2 - 3) // stride + 1
        Wo = (W + 2 - 3) // stride + 1
        assert out.shape == (N, Cout, Ho, Wo), (out.shape, (N, Cout, Ho, Wo))
        err = float(jnp.max(jnp.abs(out - ref)))
        assert jnp.allclose(out, ref, rtol=1e-4, atol=1e-4), (stride, Cin, Cout, err)
    print("KERNEL_OK")
</pallas_src>

<mosaic_0001>
module attributes {stable_mosaic.version = 11 : i64} {
  func.func @_residual_block_kernel(%arg0: i32, %arg1: memref<36x128xf32, #tpu.memory_space<vmem>>, %arg2: memref<16x36xf32, #tpu.memory_space<vmem>>, %arg3: memref<8x72xf32, #tpu.memory_space<vmem>>, %arg4: memref<8x6xf32, #tpu.memory_space<vmem>>, %arg5: memref<8x128xf32, #tpu.memory_space<vmem>>) attributes {dimension_semantics = [#tpu.dimension_semantics<arbitrary>], iteration_bounds = array<i64: 1>, scalar_prefetch = 0 : i64, scratch_operands = 0 : i64, tpu.core_type = #tpu.core_type<tc>, window_params = [{pipeline_mode = #tpu.pipeline_mode<synchronous>, transform_indices = @transform_0, window_bounds = array<i64: 36, 128>}, {pipeline_mode = #tpu.pipeline_mode<synchronous>, transform_indices = @transform_1, window_bounds = array<i64: 16, 36>}, {pipeline_mode = #tpu.pipeline_mode<synchronous>, transform_indices = @transform_2, window_bounds = array<i64: 8, 72>}, {pipeline_mode = #tpu.pipeline_mode<synchronous>, transform_indices = @transform_3, window_bounds = array<i64: 8, 6>}, {pipeline_mode = #tpu.pipeline_mode<synchronous>, transform_indices = @transform_4, window_bounds = array<i64: 8, 128>}]} {
    %c0 = arith.constant 0 : index
    %c0_0 = arith.constant 0 : index
    %0 = vector.load %arg4[%c0, %c0_0] : memref<8x6xf32, #tpu.memory_space<vmem>>, vector<8x6xf32>
    %1 = tpu.iota {dimensions = array<i32: 1>} : vector<1x128xi32>
    %c63_i32 = arith.constant 63 : i32
    %2 = vector.broadcast %c63_i32 : i32 to vector<1x128xi32>
    %3 = arith.andi %1, %2 : vector<1x128xi32>
    %c3_i32 = arith.constant 3 : i32
    %4 = vector.broadcast %c3_i32 : i32 to vector<1x128xi32>
    %5 = arith.shrsi %3, %4 : vector<1x128xi32>
    %c7_i32 = arith.constant 7 : i32
    %6 = vector.broadcast %c7_i32 : i32 to vector<1x128xi32>
    %7 = arith.andi %3, %6 : vector<1x128xi32>
    %c-1_i32 = arith.constant -1 : i32
    %8 = vector.broadcast %c-1_i32 : i32 to vector<1x128xi32>
    %9 = arith.addi %5, %8 : vector<1x128xi32>
    %c0_i32 = arith.constant 0 : i32
    %10 = vector.broadcast %c0_i32 : i32 to vector<1x128xi32>
    %11 = arith.cmpi sge, %9, %10 : vector<1x128xi32>
    %c-1_i32_1 = arith.constant -1 : i32
    %12 = vector.broadcast %c-1_i32_1 : i32 to vector<1x128xi32>
    %13 = arith.addi %5, %12 : vector<1x128xi32>
    %c8_i32 = arith.constant 8 : i32
    %14 = vector.broadcast %c8_i32 : i32 to vector<1x128xi32>
    %15 = arith.cmpi slt, %13, %14 : vector<1x128xi32>
    %16 = arith.andi %11, %15 : vector<1x128xi1>
    %c-1_i32_2 = arith.constant -1 : i32
    %17 = vector.broadcast %c-1_i32_2 : i32 to vector<1x128xi32>
    %18 = arith.addi %7, %17 : vector<1x128xi32>
    %c0_i32_3 = arith.constant 0 : i32
    %19 = vector.broadcast %c0_i32_3 : i32 to vector<1x128xi32>
    %20 = arith.cmpi sge, %18, %19 : vector<1x128xi32>
    %21 = arith.andi %16, %20 : vector<1x128xi1>
    %c-1_i32_4 = arith.constant -1 : i32
    %22 = vector.broadcast %c-1_i32_4 : i32 to vector<1x128xi32>
    %23 = arith.addi %7, %22 : vector<1x128xi32>
    %c8_i32_5 = arith.constant 8 : i32
    %24 = vector.broadcast %c8_i32_5 : i32 to vector<1x128xi32>
    %25 = arith.cmpi slt, %23, %24 : vector<1x128xi32>
    %26 = arith.andi %21, %25 : vector<1x128xi1>
    %27 = arith.extui %26 : vector<1x128xi1> to vector<1x128xi32>
    %28 = arith.sitofp %27 : vector<1x128xi32> to vector<1x128xf32>
    %c-1_i32_6 = arith.constant -1 : i32
    %29 = vector.broadcast %c-1_i32_6 : i32 to vector<1x128xi32>
    %30 = arith.addi %5, %29 : vector<1x128xi32>
    %c0_i32_7 = arith.constant 0 : i32
    %31 = vector.broadcast %c0_i32_7 : i32 to vector<1x128xi32>
    %32 = arith.cmpi sge, %30, %31 : vector<1x128xi32>
    %c-1_i32_8 = arith.constant -1 : i32
    %33 = vector.broadcast %c-1_i32_8 : i32 to vector<1x128xi32>
    %34 = arith.addi %5, %33 : vector<1x128xi32>
    %c8_i32_9 = arith.constant 8 : i32
    %35 = vector.broadcast %c8_i32_9 : i32 to vector<1x128xi32>
    %36 = arith.cmpi slt, %34, %35 : vector<1x128xi32>
    %37 = arith.andi %32, %36 : vector<1x128xi1>
    %c0_i32_10 = arith.constant 0 : i32
    %38 = vector.broadcast %c0_i32_10 : i32 to vector<1x128xi32>
    %39 = arith.addi %7, %38 : vector<1x128xi32>
    %c0_i32_11 = arith.constant 0 : i32
    %40 = vector.broadcast %c0_i32_11 : i32 to vector<1x128xi32>
    %41 = arith.cmpi sge, %39, %40 : vector<1x128xi32>
    %42 = arith.andi %37, %41 : vector<1x128xi1>
    %c0_i32_12 = arith.constant 0 : i32
    %43 = vector.broadcast %c0_i32_12 : i32 to vector<1x128xi32>
    %44 = arith.addi %7, %43 : vector<1x128xi32>
    %c8_i32_13 = arith.constant 8 : i32
    %45 = vector.broadcast %c8_i32_13 : i32 to vector<1x128xi32>
    %46 = arith.cmpi slt, %44, %45 : vector<1x128xi32>
    %47 = arith.andi %42, %46 : vector<1x128xi1>
    %48 = arith.extui %47 : vector<1x128xi1> to vector<1x128xi32>
    %49 = arith.sitofp %48 : vector<1x128xi32> to vector<1x128xf32>
    %c-1_i32_14 = arith.constant -1 : i32
    %50 = vector.broadcast %c-1_i32_14 : i32 to vector<1x128xi32>
    %51 = arith.addi %5, %50 : vector<1x128xi32>
    %c0_i32_15 = arith.constant 0 : i32
    %52 = vector.broadcast %c0_i32_15 : i32 to vector<1x128xi32>
    %53 = arith.cmpi sge, %51, %52 : vector<1x128xi32>
    %c-1_i32_16 = arith.constant -1 : i32
    %54 = vector.broadcast %c-1_i32_16 : i32 to vector<1x128xi32>
    %55 = arith.addi %5, %54 : vector<1x128xi32>
    %c8_i32_17 = arith.constant 8 : i32
    %56 = vector.broadcast %c8_i32_17 : i32 to vector<1x128xi32>
    %57 = arith.cmpi slt, %55, %56 : vector<1x128xi32>
    %58 = arith.andi %53, %57 : vector<1x128xi1>
    %c1_i32 = arith.constant 1 : i32
    %59 = vector.broadcast %c1_i32 : i32 to vector<1x128xi32>
    %60 = arith.addi %7, %59 : vector<1x128xi32>
    %c0_i32_18 = arith.constant 0 : i32
    %61 = vector.broadcast %c0_i32_18 : i32 to vector<1x128xi32>
    %62 = arith.cmpi sge, %60, %61 : vector<1x128xi32>
    %63 = arith.andi %58, %62 : vector<1x128xi1>
    %c1_i32_19 = arith.constant 1 : i32
    %64 = vector.broadcast %c1_i32_19 : i32 to vector<1x128xi32>
    %65 = arith.addi %7, %64 : vector<1x128xi32>
    %c8_i32_20 = arith.constant 8 : i32
    %66 = vector.broadcast %c8_i32_20 : i32 to vector<1x128xi32>
    %67 = arith.cmpi slt, %65, %66 : vector<1x128xi32>
    %68 = arith.andi %63, %67 : vector<1x128xi1>
    %69 = arith.extui %68 : vector<1x128xi1> to vector<1x128xi32>
    %70 = arith.sitofp %69 : vector<1x128xi32> to vector<1x128xf32>
    %c0_i32_21 = arith.constant 0 : i32
    %71 = vector.broadcast %c0_i32_21 : i32 to vector<1x128xi32>
    %72 = arith.addi %5, %71 : vector<1x128xi32>
    %c0_i32_22 = arith.constant 0 : i32
    %73 = vector.broadcast %c0_i32_22 : i32 to vector<1x128xi32>
    %74 = arith.cmpi sge, %72, %73 : vector<1x128xi32>
    %c0_i32_23 = arith.constant 0 : i32
    %75 = vector.broadcast %c0_i32_23 : i32 to vector<1x128xi32>
    %76 = arith.addi %5, %75 : vector<1x128xi32>
    %c8_i32_24 = arith.constant 8 : i32
    %77 = vector.broadcast %c8_i32_24 : i32 to vector<1x128xi32>
    %78 = arith.cmpi slt, %76, %77 : vector<1x128xi32>
    %79 = arith.andi %74, %78 : vector<1x128xi1>
    %c-1_i32_25 = arith.constant -1 : i32
    %80 = vector.broadcast %c-1_i32_25 : i32 to vector<1x128xi32>
    %81 = arith.addi %7, %80 : vector<1x128xi32>
    %c0_i32_26 = arith.constant 0 : i32
    %82 = vector.broadcast %c0_i32_26 : i32 to vector<1x128xi32>
    %83 = arith.cmpi sge, %81, %82 : vector<1x128xi32>
    %84 = arith.andi %79, %83 : vector<1x128xi1>
    %c-1_i32_27 = arith.constant -1 : i32
    %85 = vector.broadcast %c-1_i32_27 : i32 to vector<1x128xi32>
    %86 = arith.addi %7, %85 : vector<1x128xi32>
    %c8_i32_28 = arith.constant 8 : i32
    %87 = vector.broadcast %c8_i32_28 : i32 to vector<1x128xi32>
    %88 = arith.cmpi slt, %86, %87 : vector<1x128xi32>
    %89 = arith.andi %84, %88 : vector<1x128xi1>
    %90 = arith.extui %89 : vector<1x128xi1> to vector<1x128xi32>
    %91 = arith.sitofp %90 : vector<1x128xi32> to vector<1x128xf32>
    %c0_i32_29 = arith.constant 0 : i32
    %92 = vector.broadcast %c0_i32_29 : i32 to vector<1x128xi32>
    %93 = arith.addi %5, %92 : vector<1x128xi32>
    %c0_i32_30 = arith.constant 0 : i32
    %94 = vector.broadcast %c0_i32_30 : i32 to vector<1x128xi32>
    %95 = arith.cmpi sge, %93, %94 : vector<1x128xi32>
    %c0_i32_31 = arith.constant 0 : i32
    %96 = vector.broadcast %c0_i32_31 : i32 to vector<1x128xi32>
    %97 = arith.addi %5, %96 : vector<1x128xi32>
    %c8_i32_32 = arith.constant 8 : i32
    %98 = vector.broadcast %c8_i32_32 : i32 to vector<1x128xi32>
    %99 = arith.cmpi slt, %97, %98 : vector<1x128xi32>
    %100 = arith.andi %95, %99 : vector<1x128xi1>
    %c0_i32_33 = arith.constant 0 : i32
    %101 = vector.broadcast %c0_i32_33 : i32 to vector<1x128xi32>
    %102 = arith.addi %7, %101 : vector<1x128xi32>
    %c0_i32_34 = arith.constant 0 : i32
    %103 = vector.broadcast %c0_i32_34 : i32 to vector<1x128xi32>
    %104 = arith.cmpi sge, %102, %103 : vector<1x128xi32>
    %105 = arith.andi %100, %104 : vector<1x128xi1>
    %c0_i32_35 = arith.constant 0 : i32
    %106 = vector.broadcast %c0_i32_35 : i32 to vector<1x128xi32>
    %107 = arith.addi %7, %106 : vector<1x128xi32>
    %c8_i32_36 = arith.constant 8 : i32
    %108 = vector.broadcast %c8_i32_36 : i32 to vector<1x128xi32>
    %109 = arith.cmpi slt, %107, %108 : vector<1x128xi32>
    %110 = arith.andi %105, %109 : vector<1x128xi1>
    %111 = arith.extui %110 : vector<1x128xi1> to vector<1x128xi32>
    %112 = arith.sitofp %111 : vector<1x128xi32> to vector<1x128xf32>
    %c0_i32_37 = arith.constant 0 : i32
    %113 = vector.broadcast %c0_i32_37 : i32 to vector<1x128xi32>
    %114 = arith.addi %5, %113 : vector<1x128xi32>
    %c0_i32_38 = arith.constant 0 : i32
    %115 = vector.broadcast %c0_i32_38 : i32 to vector<1x128xi32>
    %116 = arith.cmpi sge, %114, %115 : vector<1x128xi32>
    %c0_i32_39 = arith.constant 0 : i32
    %117 = vector.broadcast %c0_i32_39 : i32 to vector<1x128xi32>
    %118 = arith.addi %5, %117 : vector<1x128xi32>
    %c8_i32_40 = arith.constant 8 : i32
    %119 = vector.broadcast %c8_i32_40 : i32 to vector<1x128xi32>
    %120 = arith.cmpi slt, %118, %119 : vector<1x128xi32>
    %121 = arith.andi %116, %120 : vector<1x128xi1>
    %c1_i32_41 = arith.constant 1 : i32
    %122 = vector.broadcast %c1_i32_41 : i32 to vector<1x128xi32>
    %123 = arith.addi %7, %122 : vector<1x128xi32>
    %c0_i32_42 = arith.constant 0 : i32
    %124 = vector.broadcast %c0_i32_42 : i32 to vector<1x128xi32>
    %125 = arith.cmpi sge, %123, %124 : vector<1x128xi32>
    %126 = arith.andi %121, %125 : vector<1x128xi1>
    %c1_i32_43 = arith.constant 1 : i32
    %127 = vector.broadcast %c1_i32_43 : i32 to vector<1x128xi32>
    %128 = arith.addi %7, %127 : vector<1x128xi32>
    %c8_i32_44 = arith.constant 8 : i32
    %129 = vector.broadcast %c8_i32_44 : i32 to vector<1x128xi32>
    %130 = arith.cmpi slt, %128, %129 : vector<1x128xi32>
    %131 = arith.andi %126, %130 : vector<1x128xi1>
    %132 = arith.extui %131 : vector<1x128xi1> to vector<1x128xi32>
    %133 = arith.sitofp %132 : vector<1x128xi32> to vector<1x128xf32>
    %c1_i32_45 = arith.constant 1 : i32
    %134 = vector.broadcast %c1_i32_45 : i32 to vector<1x128xi32>
    %135 = arith.addi %5, %134 : vector<1x128xi32>
    %c0_i32_46 = arith.constant 0 : i32
    %136 = vector.broadcast %c0_i32_46 : i32 to vector<1x128xi32>
    %137 = arith.cmpi sge, %135, %136 : vector<1x128xi32>
    %c1_i32_47 = arith.constant 1 : i32
    %138 = vector.broadcast %c1_i32_47 : i32 to vector<1x128xi32>
    %139 = arith.addi %5, %138 : vector<1x128xi32>
    %c8_i32_48 = arith.constant 8 : i32
    %140 = vector.broadcast %c8_i32_48 : i32 to vector<1x128xi32>
    %141 = arith.cmpi slt, %139, %140 : vector<1x128xi32>
    %142 = arith.andi %137, %141 : vector<1x128xi1>
    %c-1_i32_49 = arith.constant -1 : i32
    %143 = vector.broadcast %c-1_i32_49 : i32 to vector<1x128xi32>
    %144 = arith.addi %7, %143 : vector<1x128xi32>
    %c0_i32_50 = arith.constant 0 : i32
    %145 = vector.broadcast %c0_i32_50 : i32 to vector<1x128xi32>
    %146 = arith.cmpi sge, %144, %145 : vector<1x128xi32>
    %147 = arith.andi %142, %146 : vector<1x128xi1>
    %c-1_i32_51 = arith.constant -1 : i32
    %148 = vector.broadcast %c-1_i32_51 : i32 to vector<1x128xi32>
    %149 = arith.addi %7, %148 : vector<1x128xi32>
    %c8_i32_52 = arith.constant 8 : i32
    %150 = vector.broadcast %c8_i32_52 : i32 to vector<1x128xi32>
    %151 = arith.cmpi slt, %149, %150 : vector<1x128xi32>
    %152 = arith.andi %147, %151 : vector<1x128xi1>
    %153 = arith.extui %152 : vector<1x128xi1> to vector<1x128xi32>
    %154 = arith.sitofp %153 : vector<1x128xi32> to vector<1x128xf32>
    %c1_i32_53 = arith.constant 1 : i32
    %155 = vector.broadcast %c1_i32_53 : i32 to vector<1x128xi32>
    %156 = arith.addi %5, %155 : vector<1x128xi32>
    %c0_i32_54 = arith.constant 0 : i32
    %157 = vector.broadcast %c0_i32_54 : i32 to vector<1x128xi32>
    %158 = arith.cmpi sge, %156, %157 : vector<1x128xi32>
    %c1_i32_55 = arith.constant 1 : i32
    %159 = vector.broadcast %c1_i32_55 : i32 to vector<1x128xi32>
    %160 = arith.addi %5, %159 : vector<1x128xi32>
    %c8_i32_56 = arith.constant 8 : i32
    %161 = vector.broadcast %c8_i32_56 : i32 to vector<1x128xi32>
    %162 = arith.cmpi slt, %160, %161 : vector<1x128xi32>
    %163 = arith.andi %158, %162 : vector<1x128xi1>
    %c0_i32_57 = arith.constant 0 : i32
    %164 = vector.broadcast %c0_i32_57 : i32 to vector<1x128xi32>
    %165 = arith.addi %7, %164 : vector<1x128xi32>
    %c0_i32_58 = arith.constant 0 : i32
    %166 = vector.broadcast %c0_i32_58 : i32 to vector<1x128xi32>
    %167 = arith.cmpi sge, %165, %166 : vector<1x128xi32>
    %168 = arith.andi %163, %167 : vector<1x128xi1>
    %c0_i32_59 = arith.constant 0 : i32
    %169 = vector.broadcast %c0_i32_59 : i32 to vector<1x128xi32>
    %170 = arith.addi %7, %169 : vector<1x128xi32>
    %c8_i32_60 = arith.constant 8 : i32
    %171 = vector.broadcast %c8_i32_60 : i32 to vector<1x128xi32>
    %172 = arith.cmpi slt, %170, %171 : vector<1x128xi32>
    %173 = arith.andi %168, %172 : vector<1x128xi1>
    %174 = arith.extui %173 : vector<1x128xi1> to vector<1x128xi32>
    %175 = arith.sitofp %174 : vector<1x128xi32> to vector<1x128xf32>
    %c1_i32_61 = arith.constant 1 : i32
    %176 = vector.broadcast %c1_i32_61 : i32 to vector<1x128xi32>
    %177 = arith.addi %5, %176 : vector<1x128xi32>
    %c0_i32_62 = arith.constant 0 : i32
    %178 = vector.broadcast %c0_i32_62 : i32 to vector<1x128xi32>
    %179 = arith.cmpi sge, %177, %178 : vector<1x128xi32>
    %c1_i32_63 = arith.constant 1 : i32
    %180 = vector.broadcast %c1_i32_63 : i32 to vector<1x128xi32>
    %181 = arith.addi %5, %180 : vector<1x128xi32>
    %c8_i32_64 = arith.constant 8 : i32
    %182 = vector.broadcast %c8_i32_64 : i32 to vector<1x128xi32>
    %183 = arith.cmpi slt, %181, %182 : vector<1x128xi32>
    %184 = arith.andi %179, %183 : vector<1x128xi1>
    %c1_i32_65 = arith.constant 1 : i32
    %185 = vector.broadcast %c1_i32_65 : i32 to vector<1x128xi32>
    %186 = arith.addi %7, %185 : vector<1x128xi32>
    %c0_i32_66 = arith.constant 0 : i32
    %187 = vector.broadcast %c0_i32_66 : i32 to vector<1x128xi32>
    %188 = arith.cmpi sge, %186, %187 : vector<1x128xi32>
    %189 = arith.andi %184, %188 : vector<1x128xi1>
    %c1_i32_67 = arith.constant 1 : i32
    %190 = vector.broadcast %c1_i32_67 : i32 to vector<1x128xi32>
    %191 = arith.addi %7, %190 : vector<1x128xi32>
    %c8_i32_68 = arith.constant 8 : i32
    %192 = vector.broadcast %c8_i32_68 : i32 to vector<1x128xi32>
    %193 = arith.cmpi slt, %191, %192 : vector<1x128xi32>
    %194 = arith.andi %189, %193 : vector<1x128xi1>
    %195 = arith.extui %194 : vector<1x128xi1> to vector<1x128xi32>
    %196 = arith.sitofp %195 : vector<1x128xi32> to vector<1x128xf32>
    %c0_69 = arith.constant 0 : index
    %c0_70 = arith.constant 0 : index
    %197 = vector.load %arg2[%c0_69, %c0_70] : memref<16x36xf32, #tpu.memory_space<vmem>>, vector<16x36xf32>
    %c0_71 = arith.constant 0 : index
    %c0_72 = arith.constant 0 : index
    %198 = vector.load %arg1[%c0_71, %c0_72] : memref<36x128xf32, #tpu.memory_space<vmem>>, vector<36x128xf32>
    %cst = arith.constant dense<0.000000e+00> : vector<16x128xf32>
    %199 = tpu.matmul %197, %198, %cst {dimension_numbers = #tpu.dot_dimension_numbers<[1], [0], [0], [1], [0, 0, 1, 1], [], []>} : vector<16x36xf32>, vector<36x128xf32>, vector<16x128xf32> -> vector<16x128xf32>
    %200 = vector.extract_strided_slice %199 {offsets = [0, 0], sizes = [8, 128], strides = [1, 1]} : vector<16x128xf32> to vector<8x128xf32>
    %201 = vector.extract_strided_slice %0 {offsets = [0, 0], sizes = [8, 1], strides = [1, 1]} : vector<8x6xf32> to vector<8x1xf32>
    %202 = vector.extract_strided_slice %0 {offsets = [0, 1], sizes = [8, 1], strides = [1, 1]} : vector<8x6xf32> to vector<8x1xf32>
    %cst_73 = arith.constant dense<0.000000e+00> : vector<8xf32>
    %203 = vector.multi_reduction <add>, %200, %cst_73 [1] : vector<8x128xf32> to vector<8xf32>
    %204 = vector.shape_cast %203 : vector<8xf32> to vector<8x1xf32>
    %cst_74 = arith.constant 7.812500e-03 : f32
    %205 = vector.broadcast %cst_74 : f32 to vector<8x1xf32>
    %206 = arith.mulf %204, %205 : vector<8x1xf32>
    %207 = vector.broadcast %206 : vector<8x1xf32> to vector<8x128xf32>
    %208 = arith.subf %200, %207 : vector<8x128xf32>
    %209 = arith.mulf %208, %208 : vector<8x128xf32>
    %cst_75 = arith.constant dense<0.000000e+00> : vector<8xf32>
    %210 = vector.multi_reduction <add>, %209, %cst_75 [1] : vector<8x128xf32> to vector<8xf32>
    %211 = vector.shape_cast %210 : vector<8xf32> to vector<8x1xf32>
    %cst_76 = arith.constant 7.812500e-03 : f32
    %212 = vector.broadcast %cst_76 : f32 to vector<8x1xf32>
    %213 = arith.mulf %211, %212 : vector<8x1xf32>
    %cst_77 = arith.constant 9.99999974E-6 : f32
    %214 = vector.broadcast %cst_77 : f32 to vector<8x1xf32>
    %215 = arith.addf %213, %214 : vector<8x1xf32>
    %216 = math.rsqrt %215 : vector<8x1xf32>
    %217 = arith.mulf %201, %216 : vector<8x1xf32>
    %218 = vector.broadcast %217 : vector<8x1xf32> to vector<8x128xf32>
    %219 = arith.mulf %208, %218 : vector<8x128xf32>
    %220 = vector.broadcast %202 : vector<8x1xf32> to vector<8x128xf32>
    %221 = arith.addf %219, %220 : vector<8x128xf32>
    %cst_78 = arith.constant 0.000000e+00 : f32
    %222 = vector.broadcast %cst_78 : f32 to vector<8x128xf32>
    %223 = arith.maximumf %221, %222 : vector<8x128xf32>
    %224 = vector.extract_strided_slice %199 {offsets = [8, 0], sizes = [8, 128], strides = [1, 1]} : vector<16x128xf32> to vector<8x128xf32>
    %225 = vector.extract_strided_slice %0 {offsets = [0, 4], sizes = [8, 1], strides = [1, 1]} : vector<8x6xf32> to vector<8x1xf32>
    %226 = vector.extract_strided_slice %0 {offsets = [0, 5], sizes = [8, 1], strides = [1, 1]} : vector<8x6xf32> to vector<8x1xf32>
    %cst_79 = arith.constant dense<0.000000e+00> : vector<8xf32>
    %227 = vector.multi_reduction <add>, %224, %cst_79 [1] : vector<8x128xf32> to vector<8xf32>
    %228 = vector.shape_cast %227 : vector<8xf32> to vector<8x1xf32>
    %cst_80 = arith.constant 7.812500e-03 : f32
    %229 = vector.broadcast %cst_80 : f32 to vector<8x1xf32>
    %230 = arith.mulf %228, %229 : vector<8x1xf32>
    %231 = vector.broadcast %230 : vector<8x1xf32> to vector<8x128xf32>
    %232 = arith.subf %224, %231 : vector<8x128xf32>
    %233 = arith.mulf %232, %232 : vector<8x128xf32>
    %cst_81 = arith.constant dense<0.000000e+00> : vector<8xf32>
    %234 = vector.multi_reduction <add>, %233, %cst_81 [1] : vector<8x128xf32> to vector<8xf32>
    %235 = vector.shape_cast %234 : vector<8xf32> to vector<8x1xf32>
    %cst_82 = arith.constant 7.812500e-03 : f32
    %236 = vector.broadcast %cst_82 : f32 to vector<8x1xf32>
    %237 = arith.mulf %235, %236 : vector<8x1xf32>
    %cst_83 = arith.constant 9.99999974E-6 : f32
    %238 = vector.broadcast %cst_83 : f32 to vector<8x1xf32>
    %239 = arith.addf %237, %238 : vector<8x1xf32>
    %240 = math.rsqrt %239 : vector<8x1xf32>
    %241 = arith.mulf %225, %240 : vector<8x1xf32>
    %242 = vector.broadcast %241 : vector<8x1xf32> to vector<8x128xf32>
    %243 = arith.mulf %232, %242 : vector<8x128xf32>
    %244 = vector.broadcast %226 : vector<8x1xf32> to vector<8x128xf32>
    %245 = arith.addf %243, %244 : vector<8x128xf32>
    %c9_i32 = arith.constant 9 : i32
    %246 = tpu.dynamic_rotate %223 by %c9_i32 dim 1 : vector<8x128xf32>, i32 -> vector<8x128xf32>
    %247 = vector.broadcast %28 : vector<1x128xf32> to vector<8x128xf32>
    %248 = arith.mulf %246, %247 : vector<8x128xf32>
    %c8_i32_84 = arith.constant 8 : i32
    %249 = tpu.dynamic_rotate %223 by %c8_i32_84 dim 1 : vector<8x128xf32>, i32 -> vector<8x128xf32>
    %250 = vector.broadcast %49 : vector<1x128xf32> to vector<8x128xf32>
    %251 = arith.mulf %249, %250 : vector<8x128xf32>
    %c7_i32_85 = arith.constant 7 : i32
    %252 = tpu.dynamic_rotate %223 by %c7_i32_85 dim 1 : vector<8x128xf32>, i32 -> vector<8x128xf32>
    %253 = vector.broadcast %70 : vector<1x128xf32> to vector<8x128xf32>
    %254 = arith.mulf %252, %253 : vector<8x128xf32>
    %c1_i32_86 = arith.constant 1 : i32
    %255 = tpu.dynamic_rotate %223 by %c1_i32_86 dim 1 : vector<8x128xf32>, i32 -> vector<8x128xf32>
    %256 = vector.broadcast %91 : vector<1x128xf32> to vector<8x128xf32>
    %257 = arith.mulf %255, %256 : vector<8x128xf32>
    %258 = vector.broadcast %112 : vector<1x128xf32> to vector<8x128xf32>
    %259 = arith.mulf %223, %258 : vector<8x128xf32>
    %c127_i32 = arith.constant 127 : i32
    %260 = tpu.dynamic_rotate %223 by %c127_i32 dim 1 : vector<8x128xf32>, i32 -> vector<8x128xf32>
    %261 = vector.broadcast %133 : vector<1x128xf32> to vector<8x128xf32>
    %262 = arith.mulf %260, %261 : vector<8x128xf32>
    %c121_i32 = arith.constant 121 : i32
    %263 = tpu.dynamic_rotate %223 by %c121_i32 dim 1 : vector<8x128xf32>, i32 -> vector<8x128xf32>
    %264 = vector.broadcast %154 : vector<1x128xf32> to vector<8x128xf32>
    %265 = arith.mulf %263, %264 : vector<8x128xf32>
    %c120_i32 = arith.constant 120 : i32
    %266 = tpu.dynamic_rotate %223 by %c120_i32 dim 1 : vector<8x128xf32>, i32 -> vector<8x128xf32>
    %267 = vector.broadcast %175 : vector<1x128xf32> to vector<8x128xf32>
    %268 = arith.mulf %266, %267 : vector<8x128xf32>
    %c119_i32 = arith.constant 119 : i32
    %269 = tpu.dynamic_rotate %223 by %c119_i32 dim 1 : vector<8x128xf32>, i32 -> vector<8x128xf32>
    %270 = vector.broadcast %196 : vector<1x128xf32> to vector<8x128xf32>
    %271 = arith.mulf %269, %270 : vector<8x128xf32>
    %272 = tpu.concatenate %248, %251, %254, %257, %259, %262, %265, %268, %271 in 0 : vector<8x128xf32>, vector<8x128xf32>, vector<8x128xf32>, vector<8x128xf32>, vector<8x128xf32>, vector<8x128xf32>, vector<8x128xf32>, vector<8x128xf32>, vector<8x128xf32> -> vector<72x128xf32>
    %c0_87 = arith.constant 0 : index
    %c0_88 = arith.constant 0 : index
    %273 = vector.load %arg3[%c0_87, %c0_88] : memref<8x72xf32, #tpu.memory_space<vmem>>, vector<8x72xf32>
    %cst_89 = arith.constant dense<0.000000e+00> : vector<8x128xf32>
    %274 = tpu.matmul %273, %272, %cst_89 {dimension_numbers = #tpu.dot_dimension_numbers<[1], [0], [0], [1], [0, 0, 1, 1], [], []>} : vector<8x72xf32>, vector<72x128xf32>, vector<8x128xf32> -> vector<8x128xf32>
    %275 = vector.extract_strided_slice %0 {offsets = [0, 2], sizes = [8, 1], strides = [1, 1]} : vector<8x6xf32> to vector<8x1xf32>
    %276 = vector.extract_strided_slice %0 {offsets = [0, 3], sizes = [8, 1], strides = [1, 1]} : vector<8x6xf32> to vector<8x1xf32>
    %cst_90 = arith.constant dense<0.000000e+00> : vector<8xf32>
    %277 = vector.multi_reduction <add>, %274, %cst_90 [1] : vector<8x128xf32> to vector<8xf32>
    %278 = vector.shape_cast %277 : vector<8xf32> to vector<8x1xf32>
    %cst_91 = arith.constant 7.812500e-03 : f32
    %279 = vector.broadcast %cst_91 : f32 to vector<8x1xf32>
    %280 = arith.mulf %278, %279 : vector<8x1xf32>
    %281 = vector.broadcast %280 : vector<8x1xf32> to vector<8x128xf32>
    %282 = arith.subf %274, %281 : vector<8x128xf32>
    %283 = arith.mulf %282, %282 : vector<8x128xf32>
    %cst_92 = arith.constant dense<0.000000e+00> : vector<8xf32>
    %284 = vector.multi_reduction <add>, %283, %cst_92 [1] : vector<8x128xf32> to vector<8xf32>
    %285 = vector.shape_cast %284 : vector<8xf32> to vector<8x1xf32>
    %cst_93 = arith.constant 7.812500e-03 : f32
    %286 = vector.broadcast %cst_93 : f32 to vector<8x1xf32>
    %287 = arith.mulf %285, %286 : vector<8x1xf32>
    %cst_94 = arith.constant 9.99999974E-6 : f32
    %288 = vector.broadcast %cst_94 : f32 to vector<8x1xf32>
    %289 = arith.addf %287, %288 : vector<8x1xf32>
    %290 = math.rsqrt %289 : vector<8x1xf32>
    %291 = arith.mulf %275, %290 : vector<8x1xf32>
    %292 = vector.broadcast %291 : vector<8x1xf32> to vector<8x128xf32>
    %293 = arith.mulf %282, %292 : vector<8x128xf32>
    %294 = vector.broadcast %276 : vector<8x1xf32> to vector<8x128xf32>
    %295 = arith.addf %293, %294 : vector<8x128xf32>
    %296 = arith.addf %295, %245 : vector<8x128xf32>
    %cst_95 = arith.constant 0.000000e+00 : f32
    %297 = vector.broadcast %cst_95 : f32 to vector<8x128xf32>
    %298 = arith.maximumf %296, %297 : vector<8x128xf32>
    %c0_96 = arith.constant 0 : index
    %c0_97 = arith.constant 0 : index
    %299 = vector.load %arg5[%c0_96, %c0_97] : memref<8x128xf32, #tpu.memory_space<vmem>>, vector<8x128xf32>
    tpu.vector_store %arg5[%c0_96, %c0_97], %298 {strides = array<i32>} : memref<8x128xf32, #tpu.memory_space<vmem>>, vector<8x128xf32>,
    return
  }
  func.func @transform_0(%arg0: i32) -> (i32, i32) {
    %c0_i32 = arith.constant 0 : i32
    %c0_i32_0 = arith.constant 0 : i32
    %c0_i32_1 = arith.constant 0 : i32
    return %c0_i32, %c0_i32_0 : i32, i32
  }
  func.func @transform_1(%arg0: i32) -> (i32, i32) {
    %c0_i32 = arith.constant 0 : i32
    %c0_i32_0 = arith.constant 0 : i32
    %c0_i32_1 = arith.constant 0 : i32
    return %c0_i32, %c0_i32_0 : i32, i32
  }
  func.func @transform_2(%arg0: i32) -> (i32, i32) {
    %c0_i32 = arith.constant 0 : i32
    %c0_i32_0 = arith.constant 0 : i32
    %c0_i32_1 = arith.constant 0 : i32
    return %c0_i32, %c0_i32_0 : i32, i32
  }
  func.func @transform_3(%arg0: i32) -> (i32, i32) {
    %c0_i32 = arith.constant 0 : i32
    %c0_i32_0 = arith.constant 0 : i32
    %c0_i32_1 = arith.constant 0 : i32
    return %c0_i32, %c0_i32_0 : i32, i32
  }
  func.func @transform_4(%arg0: i32) -> (i32, i32) {
    %c0_i32 = arith.constant 0 : i32
    %c0_i32_0 = arith.constant 0 : i32
    %c0_i32_1 = arith.constant 0 : i32
    return %c0_i32, %c0_i32_0 : i32, i32
  }
}

</mosaic_0001>

<llo_original>
// kernel: tpu_custom_call.1
$region0: #{tpu_custom_call.1}
  #allocation0 [shape = 'u32[]', space=smem, size = 0x4, offset = 0x4, fixed_abs, tag = 'smem constant byte address 0x4 - core index']
  #allocation1 [shape = 'u32[144,128]{1,0:T(1,128)}', space=vmem, size = 0x12000, scoped, tag = 'internal scratch']
  %s0 = inlined_call_operand.hbm [shape: f32[36,128], index: 0, kind: input, shape index: {}]
  %s1 = inlined_call_operand.hbm [shape: f32[16,36], index: 1, kind: input, shape index: {}]
  %s2 = inlined_call_operand.hbm [shape: f32[8,72], index: 2, kind: input, shape index: {}]
  %s3 = inlined_call_operand.hbm [shape: f32[8,6], index: 3, kind: input, shape index: {}]
  %s4 = inlined_call_operand.hbm [shape: f32[8,128], index: 4, kind: output, shape index: {}]
  %s5 = sld [smem:[#allocation0]]
  $region42: #{tpu_custom_call.1} parent=0
    _
  %s7 = ssub.s32 1, %s5
  %s8 = scalar_select 0, %s7, %s5
  $region1: #{tpu_custom_call.1} parent=0
    #allocation2 [shape = 'u8[20480]{0}', space=vmem, size = 0x5000, scoped, tag = 'input window, operand 0, single buffered']
    #allocation3 [shape = 's32[1]{0}', space=sflag, size = 0x4, scoped, tag = 'scoped memory for tpu_custom_call.1']
    #allocation4 [shape = 's32[1]{0}', space=sflag, size = 0x4, scoped, tag = 'scoped memory for tpu_custom_call.1']
    #allocation5 [shape = 'u8[8192]{0}', space=vmem, size = 0x2000, scoped, tag = 'input window, operand 1, single buffered']
    #allocation6 [shape = 's32[1]{0}', space=sflag, size = 0x4, scoped, tag = 'scoped memory for tpu_custom_call.1']
    #allocation7 [shape = 'u8[4096]{0}', space=vmem, size = 0x1000, scoped, tag = 'input window, operand 2, single buffered']
    #allocation8 [shape = 'u8[4096]{0}', space=vmem, size = 0x1000, scoped, tag = 'input window, operand 3, single buffered']
    #allocation9 [shape = 's32[1]{0}', space=sflag, size = 0x4, scoped, tag = 'scoped memory for tpu_custom_call.1']
    #allocation10 [shape = 'u8[4096]{0}', space=vmem, size = 0x1000, scoped, tag = 'output window, operand 0, single buffered']
    %9 = vsyncpa [#allocation3], 0
    %10 = vsyncpa [#allocation6], 0
    %11 = vsyncpa [#allocation9], 0
    %12 = vsyncpa [#allocation4], 0
    // Predicated region
    $region2: #{tpu_custom_call.1} parent=1 // pred_check
      _
    $region3: #{tpu_custom_call.1} parent=1 // pred_check_branch
      %14 = sbr.rel (0) target = $region5
    $region4: #{tpu_custom_call.1} parent=1 // pred_region
      %s16 = ssub.s32 640, 640
      %17 = vsyncadd [#allocation3], %s16
      %s18 = sshll.u32 [#allocation2], 4
      %s19 = int_to_ptr.vmem [resolvable:$true] %s18
      %24 = dma.hbm_to_vmem [thread:$0]  %s0, 640, %s19, [#allocation3], 128, 128, 8
    $region5: #{tpu_custom_call.1} parent=1 // pred_fallthru
      _
    // Predicated region
    $region6: #{tpu_custom_call.1} parent=1 // pred_check
      _
    $region7: #{tpu_custom_call.1} parent=1 // pred_check_branch
      %26 = sbr.rel (0) target = $region9
    $region8: #{tpu_custom_call.1} parent=1 // pred_region
      %s28 = ssub.s32 256, 256
      %29 = vsyncadd [#allocation6], %s28
      %s30 = sshll.u32 [#allocation5], 4
      %s31 = int_to_ptr.vmem [resolvable:$true] %s30
      %36 = dma.hbm_to_vmem [thread:$0]  %s1, 256, %s31, [#allocation6], 128, 128, 8
    $region9: #{tpu_custom_call.1} parent=1 // pred_fallthru
      _
    // Predicated region
    $region10: #{tpu_custom_call.1} parent=1 // pred_check
      _
    $region11: #{tpu_custom_call.1} parent=1 // pred_check_branch
      %38 = sbr.rel (0) target = $region13
    $region12: #{tpu_custom_call.1} parent=1 // pred_region
      %s40 = ssub.s32 128, 128
      %41 = vsyncadd [#allocation6], %s40
      %s43 = sshll.u32 [#allocation7], 4
      %s44 = int_to_ptr.vmem [resolvable:$true] %s43
      %46 = dma.hbm_to_vmem [thread:$0]  %s2, 128, %s44, [#allocation6]
    $region13: #{tpu_custom_call.1} parent=1 // pred_fallthru
      _
    // Predicated region
    $region14: #{tpu_custom_call.1} parent=1 // pred_check
      _
    $region15: #{tpu_custom_call.1} parent=1 // pred_check_branch
      %48 = sbr.rel (0) target = $region17
    $region16: #{tpu_custom_call.1} parent=1 // pred_region
      %s50 = ssub.s32 128, 128
      %51 = vsyncadd [#allocation9], %s50
      %s53 = sshll.u32 [#allocation8], 4
      %s54 = int_to_ptr.vmem [resolvable:$true] %s53
      %56 = dma.hbm_to_vmem [thread:$0]  %s3, 128, %s54, [#allocation9]
    $region17: #{tpu_custom_call.1} parent=1 // pred_fallthru
      _
    // Predicated region
    $region18: #{tpu_custom_call.1} parent=1 // pred_check
      _
    $region19: #{tpu_custom_call.1} parent=1 // pred_check_branch
      %58 = sbr.rel (0) target = $region21
    $region20: #{tpu_custom_call.1} parent=1 // pred_region
      %59 = dma.done [#allocation3], 640
    $region21: #{tpu_custom_call.1} parent=1 // pred_fallthru
      _
    // Predicated region
    $region22: #{tpu_custom_call.1} parent=1 // pred_check
      _
    $region23: #{tpu_custom_call.1} parent=1 // pred_check_branch
      %61 = sbr.rel (0) target = $region25
    $region24: #{tpu_custom_call.1} parent=1 // pred_region
      %62 = dma.done [#allocation6], 256
    $region25: #{tpu_custom_call.1} parent=1 // pred_fallthru
      _
    // Predicated region
    $region26: #{tpu_custom_call.1} parent=1 // pred_check
      _
    $region27: #{tpu_custom_call.1} parent=1 // pred_check_branch
      %64 = sbr.rel (0) target = $region29
    $region28: #{tpu_custom_call.1} parent=1 // pred_region
      %65 = dma.done [#allocation6], 128
    $region29: #{tpu_custom_call.1} parent=1 // pred_fallthru
      _
    // Predicated region
    $region30: #{tpu_custom_call.1} parent=1 // pred_check
      _
    $region31: #{tpu_custom_call.1} parent=1 // pred_check_branch
      %67 = sbr.rel (0) target = $region33
    $region32: #{tpu_custom_call.1} parent=1 // pred_region
      %68 = dma.done [#allocation9], 128
    $region33: #{tpu_custom_call.1} parent=1 // pred_fallthru
      _
    %v69 = vld [vmem:[#allocation8] sm:$0xff]
    %v70 = vlaneseq
    %v71 = vand.u32 %v70, 127
    %v72 = vand.u32 %v71, 63
    %v73 = vshra.s32 %v72, 3
    %v74 = vand.u32 %v72, 7
    %v75 = vadd.s32 %v73, 4294967295
    %vm76 = vcmp.ge.s32.totalorder %v75, 0
    %vm77 = vcmp.lt.s32.totalorder %v75, 8
    %vm78 = vmand %vm76, %vm77
    %v79 = vadd.s32 %v74, 4294967295
    %vm80 = vcmp.ge.s32.totalorder %v79, 0
    %vm81 = vmand %vm78, %vm80
    %vm82 = vcmp.lt.s32.totalorder %v79, 8
    %vm83 = vmand %vm81, %vm82
    %v84 = vsel %vm83, 1, 0
    %v85 = vcvt.s32.f32 %v84
    %vm86 = vcmp.ge.s32.totalorder %v74, 0
    %vm87 = vmand %vm78, %vm86
    %vm88 = vcmp.lt.s32.totalorder %v74, 8
    %vm89 = vmand %vm87, %vm88
    %v90 = vsel %vm89, 1, 0
    %v91 = vcvt.s32.f32 %v90
    %v92 = vadd.s32 %v74, 1
    %vm93 = vcmp.ge.s32.totalorder %v92, 0
    %vm94 = vmand %vm78, %vm93
    %vm95 = vcmp.lt.s32.totalorder %v92, 8
    %vm96 = vmand %vm94, %vm95
    %v97 = vsel %vm96, 1, 0
    %v98 = vcvt.s32.f32 %v97
    %vm99 = vcmp.ge.s32.totalorder %v73, 0
    %vm100 = vcmp.lt.s32.totalorder %v73, 8
    %vm101 = vmand %vm99, %vm100
    %vm102 = vmand %vm101, %vm80
    %vm103 = vmand %vm102, %vm82
    %v104 = vsel %vm103, 1, 0
    %v105 = vcvt.s32.f32 %v104
    %vm106 = vmand %vm101, %vm86
    %vm107 = vmand %vm106, %vm88
    %v108 = vsel %vm107, 1, 0
    %v109 = vcvt.s32.f32 %v108
    %vm110 = vmand %vm101, %vm93
    %vm111 = vmand %vm110, %vm95
    %v112 = vsel %vm111, 1, 0
    %v113 = vcvt.s32.f32 %v112
    %v114 = vadd.s32 %v73, 1
    %vm115 = vcmp.ge.s32.totalorder %v114, 0
    %vm116 = vcmp.lt.s32.totalorder %v114, 8
    %vm117 = vmand %vm115, %vm116
    %vm118 = vmand %vm117, %vm80
    %vm119 = vmand %vm118, %vm82
    %v120 = vsel %vm119, 1, 0
    %v121 = vcvt.s32.f32 %v120
    %vm122 = vmand %vm117, %vm86
    %vm123 = vmand %vm122, %vm88
    %v124 = vsel %vm123, 1, 0
    %v125 = vcvt.s32.f32 %v124
    %vm126 = vmand %vm117, %vm93
    %vm127 = vmand %vm126, %vm95
    %v128 = vsel %vm127, 1, 0
    %v129 = vcvt.s32.f32 %v128
    %v130 = vld [vmem:[#allocation5] sm:$0xff]
    %v131 = vld [vmem:[#allocation5 + $0x8] sm:$0xff]
    %v132 = vld [vmem:[#allocation2] sm:$0xff]
    %v133 = vld [vmem:[#allocation2 + $0x8] sm:$0xff]
    %v134 = vld [vmem:[#allocation2 + $0x10] sm:$0xff]
    %v135 = vld [vmem:[#allocation2 + $0x18] sm:$0xff]
    %v136 = vld [vmem:[#allocation2 + $0x20] sm:$0xf]
    %vm137 = vcmask 293888
    %v139 = vsel %vm137, %v130, 0
    %v142 = vsel %vm137, %v131, 0
    %vm144 = vcmask 1043456
    %v146 = vsel %vm144, %v136, 0
    %148 = vmatprep.subr.mxu0 0.0
    %149 = vmatpush1.msra.mxu0 %v132
    %150 = vmatprep.subr.mxu0 0.0
    %151 = vmatpush1.msra.mxu0 %v133
    %152 = vmatprep.subr.mxu0 0.0
    %153 = vmatpush1.msra.mxu0 %v134
    %154 = vmatprep.subr.mxu0 0.0
    %155 = vmatpush1.msra.mxu0 %v135
    %156 = vmatprep.subr.mxu0 0.0
    %157 = vmatpush1.msra.mxu0 %v146
    %158 = vmatprep.subr.mxu0 0.0
    %159 = vmatpush1.msra.mxu0 0.0
    %160 = vmatprep.subr.mxu0 0.0
    %161 = vmatpush1.msra.mxu0 0.0
    %162 = vmatprep.subr.mxu0 0.0
    %163 = vmatpush1.msra.mxu0 0.0
    %164 = vmatprep.subr.mxu0 0.0
    %165 = vmatpush1.msra.mxu0 0.0
    %166 = vmatprep.subr.mxu0 0.0
    %167 = vmatpush1.msra.mxu0 0.0
    %168 = vmatprep.subr.mxu0 0.0
    %169 = vmatpush1.msra.mxu0 0.0
    %170 = vmatprep.subr.mxu0 0.0
    %171 = vmatpush1.msra.mxu0 0.0
    %172 = vmatprep.subr.mxu0 0.0
    %173 = vmatpush1.msra.mxu0 0.0
    %174 = vmatprep.subr.mxu0 0.0
    %175 = vmatpush1.msra.mxu0 0.0
    %176 = vmatprep.subr.mxu0 0.0
    %177 = vmatpush1.msra.mxu0 0.0
    %178 = vmatprep.subr.mxu0 0.0
    %179 = vmatpush1.msra.mxu0 0.0
    %180 = vmatprep.subr.mxu0 0.0
    %181 = vmatpush1.msra.mxu0 0.0
    %182 = vmatprep.subr.mxu0 0.0
    %183 = vmatpush1.msra.mxu0 0.0
    %184 = vmatprep.subr.mxu0 0.0
    %185 = vmatpush1.msra.mxu0 0.0
    %186 = vmatprep.subr.mxu0 0.0
    %187 = vmatpush1.msra.mxu0 0.0
    %188 = vmatprep.subr.mxu0 0.0
    %189 = vmatpush1.msra.mxu0 0.0
    %190 = vmatprep.subr.mxu0 0.0
    %191 = vmatpush1.msra.mxu0 0.0
    %192 = vmatprep.subr.mxu0 0.0
    %193 = vmatpush1.msra.mxu0 0.0
    %194 = vmatprep.subr.mxu0 0.0
    %195 = vmatpush1.msra.mxu0 0.0
    %196 = vmatprep.subr.mxu0 0.0
    %197 = vmatpush1.msra.mxu0 0.0
    %198 = vmatprep.subr.mxu0 0.0
    %199 = vmatpush1.msra.mxu0 0.0
    %200 = vmatprep.subr.mxu0 0.0
    %201 = vmatpush1.msra.mxu0 0.0
    %202 = vmatprep.subr.mxu0 0.0
    %203 = vmatpush1.msra.mxu0 0.0
    %204 = vmatprep.subr.mxu0 0.0
    %205 = vmatpush1.msra.mxu0 0.0
    %206 = vmatprep.subr.mxu0 0.0
    %207 = vmatpush1.msra.mxu0 0.0
    %208 = vmatprep.subr.mxu0 0.0
    %209 = vmatpush1.msra.mxu0 0.0
    %210 = vmatprep.subr.mxu0 0.0
    %211 = vmatpush1.msra.mxu0 0.0
    %212 = vmatprep.mubr.f32.mxu0 0.0
    %213 = vmatmul.mubr.f32.gmra.mrb[0].mxu0 %v139
    %v214 = vpop.f32.mrb[0].mxu0
    %v215 = vadd.f32 0.0, %v214
    %v216 = vpop.f32.mrb[0].mxu0
    %217 = vmatprep.mubr.f32.mxu0 0.0
    %218 = vmatmul.mubr.f32.gmra.mrb[0].mxu0 %v142
    %v219 = vpop.f32.mrb[0].mxu0
    %v220 = vadd.f32 0.0, %v219
    %v221 = vpop.f32.mrb[0].mxu0
    %222 = vdwg.mxu0
    %223 = vadd.xlane.f32.xlu0 %v215
    %v224 = vpop.xlane.xlu0 %223
    %v225 = vmul.f32 %v224, 0.0078125
    %v226 = vsub.f32 %v215, %v225
    %v227 = vmul.f32 %v226, %v226
    %228 = vadd.xlane.f32.xlu0 %v227
    %v229 = vpop.xlane.xlu0 %228
    %v230 = vmul.f32 %v229, 0.0078125
    %v231 = vadd.f32 %v230, 1e-05
    %v232 = vrsqrt.pop %v231
    %v233 = vmul.f32 %v69, %v232
    %235 = vset.pattern.permute.xlu0 0
    %236 = vperm.xlu0 %235, %v233
    %v237 = vpop.permute.xlu0 %236
    %v239 = vmul.f32 %v226, %v237
    %241 = vset.pattern.permute.xlu0 1
    %242 = vperm.xlu0 %241, %v69
    %v243 = vpop.permute.xlu0 %242
    %v245 = vadd.f32 %v239, %v243
    %v246 = vmax.f32 %v245, 0.0
    %247 = vadd.xlane.f32.xlu0 %v220
    %v248 = vpop.xlane.xlu0 %247
    %v249 = vmul.f32 %v248, 0.0078125
    %v250 = vsub.f32 %v220, %v249
    %v251 = vmul.f32 %v250, %v250
    %252 = vadd.xlane.f32.xlu0 %v251
    %v253 = vpop.xlane.xlu0 %252
    %v254 = vmul.f32 %v253, 0.0078125
    %v255 = vadd.f32 %v254, 1e-05
    %v256 = vrsqrt.pop %v255
    %v257 = vmul.f32 %v69, %v256
    %259 = vset.pattern.permute.xlu0 4
    %260 = vperm.xlu0 %259, %v257
    %v261 = vpop.permute.xlu0 %260
    %v263 = vmul.f32 %v250, %v261
    %264 = vset.pattern.permute.xlu0 5
    %265 = vperm.xlu0 %264, %v69
    %v266 = vpop.permute.xlu0 %265
    %v268 = vadd.f32 %v263, %v266
    %269 = vrot.lane.b32.xlu0 %v246, 9
    %v270 = vpop.permute.xlu0 %269
    %v271 = vmul.f32 %v270, %v85
    %272 = vrot.lane.b32.xlu0 %v246, 8
    %v273 = vpop.permute.xlu0 %272
    %v274 = vmul.f32 %v273, %v91
    %275 = vrot.lane.b32.xlu0 %v246, 7
    %v276 = vpop.permute.xlu0 %275
    %v277 = vmul.f32 %v276, %v98
    %278 = vrot.lane.b32.xlu0 %v246, 1
    %v279 = vpop.permute.xlu0 %278
    %v280 = vmul.f32 %v279, %v105
    %v281 = vmul.f32 %v246, %v109
    %282 = vrot.lane.b32.xlu0 %v246, 127
    %v283 = vpop.permute.xlu0 %282
    %v284 = vmul.f32 %v283, %v113
    %285 = vrot.lane.b32.xlu0 %v246, 121
    %v286 = vpop.permute.xlu0 %285
    %v287 = vmul.f32 %v286, %v121
    %288 = vrot.lane.b32.xlu0 %v246, 120
    %v289 = vpop.permute.xlu0 %288
    %v290 = vmul.f32 %v289, %v125
    %291 = vrot.lane.b32.xlu0 %v246, 119
    %v292 = vpop.permute.xlu0 %291
    %v293 = vmul.f32 %v292, %v129
    %v294 = vld [vmem:[#allocation7] sm:$0xff]
    %vm295 = vcmask 588800
    %v297 = vsel %vm295, %v294, 0
    %299 = vmatprep.subr.mxu0 0.0
    %300 = vmatpush1.msra.mxu0 %v271
    %301 = vmatprep.subr.mxu0 0.0
    %302 = vmatpush1.msra.mxu0 %v274
    %303 = vmatprep.subr.mxu0 0.0
    %304 = vmatpush1.msra.mxu0 %v277
    %305 = vmatprep.subr.mxu0 0.0
    %306 = vmatpush1.msra.mxu0 %v280
    %307 = vmatprep.subr.mxu0 0.0
    %308 = vmatpush1.msra.mxu0 %v281
    %309 = vmatprep.subr.mxu0 0.0
    %310 = vmatpush1.msra.mxu0 %v284
    %311 = vmatprep.subr.mxu0 0.0
    %312 = vmatpush1.msra.mxu0 %v287
    %313 = vmatprep.subr.mxu0 0.0
    %314 = vmatpush1.msra.mxu0 %v290
    %315 = vmatprep.subr.mxu0 0.0
    %316 = vmatpush1.msra.mxu0 %v293
    %317 = vmatprep.subr.mxu0 0.0
    %318 = vmatpush1.msra.mxu0 0.0
    %319 = vmatprep.subr.mxu0 0.0
    %320 = vmatpush1.msra.mxu0 0.0
    %321 = vmatprep.subr.mxu0 0.0
    %322 = vmatpush1.msra.mxu0 0.0
    %323 = vmatprep.subr.mxu0 0.0
    %324 = vmatpush1.msra.mxu0 0.0
    %325 = vmatprep.subr.mxu0 0.0
    %326 = vmatpush1.msra.mxu0 0.0
    %327 = vmatprep.subr.mxu0 0.0
    %328 = vmatpush1.msra.mxu0 0.0
    %329 = vmatprep.subr.mxu0 0.0
    %330 = vmatpush1.msra.mxu0 0.0
    %331 = vmatprep.subr.mxu0 0.0
    %332 = vmatpush1.msra.mxu0 0.0
    %333 = vmatprep.subr.mxu0 0.0
    %334 = vmatpush1.msra.mxu0 0.0
    %335 = vmatprep.subr.mxu0 0.0
    %336 = vmatpush1.msra.mxu0 0.0
    %337 = vmatprep.subr.mxu0 0.0
    %338 = vmatpush1.msra.mxu0 0.0
    %339 = vmatprep.subr.mxu0 0.0
    %340 = vmatpush1.msra.mxu0 0.0
    %341 = vmatprep.subr.mxu0 0.0
    %342 = vmatpush1.msra.mxu0 0.0
    %343 = vmatprep.subr.mxu0 0.0
    %344 = vmatpush1.msra.mxu0 0.0
    %345 = vmatprep.subr.mxu0 0.0
    %346 = vmatpush1.msra.mxu0 0.0
    %347 = vmatprep.subr.mxu0 0.0
    %348 = vmatpush1.msra.mxu0 0.0
    %349 = vmatprep.subr.mxu0 0.0
    %350 = vmatpush1.msra.mxu0 0.0
    %351 = vmatprep.subr.mxu0 0.0
    %352 = vmatpush1.msra.mxu0 0.0
    %353 = vmatprep.subr.mxu0 0.0
    %354 = vmatpush1.msra.mxu0 0.0
    %355 = vmatprep.subr.mxu0 0.0
    %356 = vmatpush1.msra.mxu0 0.0
    %357 = vmatprep.subr.mxu0 0.0
    %358 = vmatpush1.msra.mxu0 0.0
    %359 = vmatprep.subr.mxu0 0.0
    %360 = vmatpush1.msra.mxu0 0.0
    %361 = vmatprep.subr.mxu0 0.0
    %362 = vmatpush1.msra.mxu0 0.0
    %363 = vmatprep.mubr.f32.mxu0 0.0
    %364 = vmatmul.mubr.f32.gmra.mrb[0].mxu0 %v297
    %v365 = vpop.f32.mrb[0].mxu0
    %v366 = vadd.f32 0.0, %v365
    %v367 = vpop.f32.mrb[0].mxu0
    %368 = vdwg.mxu0
    %369 = vadd.xlane.f32.xlu0 %v366
    %v370 = vpop.xlane.xlu0 %369
    %v371 = vmul.f32 %v370, 0.0078125
    %v372 = vsub.f32 %v366, %v371
    %v373 = vmul.f32 %v372, %v372
    %374 = vadd.xlane.f32.xlu0 %v373
    %v375 = vpop.xlane.xlu0 %374
    %v376 = vmul.f32 %v375, 0.0078125
    %v377 = vadd.f32 %v376, 1e-05
    %v378 = vrsqrt.pop %v377
    %v379 = vmul.f32 %v69, %v378
    %381 = vset.pattern.permute.xlu0 2
    %382 = vperm.xlu0 %381, %v379
    %v383 = vpop.permute.xlu0 %382
    %v385 = vmul.f32 %v372, %v383
    %386 = vset.pattern.permute.xlu0 3
    %387 = vperm.xlu0 %386, %v69
    %v388 = vpop.permute.xlu0 %387
    %v390 = vadd.f32 %v385, %v388
    %v391 = vadd.f32 %v390, %v268
    %v392 = vmax.f32 %v391, 0.0
    %393 = vst [vmem:[#allocation10] sm:$0xff] %v392
    // Predicated region
    $region34: #{tpu_custom_call.1} parent=1 // pred_check
      _
    $region35: #{tpu_custom_call.1} parent=1 // pred_check_branch
      %395 = sbr.rel (0) target = $region37
    $region36: #{tpu_custom_call.1} parent=1 // pred_region
      %s397 = ssub.s32 128, 128
      %398 = vsyncadd [#allocation4], %s397
      %s400 = sshll.u32 [#allocation10], 4
      %s401 = int_to_ptr.vmem [resolvable:$true] %s400
      %403 = dma.vmem_to_hbm [thread:$0]  %s401, 128, %s4, [#allocation4]
    $region37: #{tpu_custom_call.1} parent=1 // pred_fallthru
      _
    // Predicated region
    $region38: #{tpu_custom_call.1} parent=1 // pred_check
      _
    $region39: #{tpu_custom_call.1} parent=1 // pred_check_branch
      %405 = sbr.rel (0) target = $region41
    $region40: #{tpu_custom_call.1} parent=1 // pred_region
      %406 = dma.done [#allocation4], 128
    $region41: #{tpu_custom_call.1} parent=1 // pred_fallthru
      _
    %407 = vsyncpa [#allocation3], 1
    %408 = vsyncpa [#allocation6], 1
    %409 = vsyncpa [#allocation9], 1
    %410 = vsyncpa [#allocation4], 1

</llo_original>
